<compile_context>
chip_gen: v7x
topology: tpu7x:2x2x1
jax: 0.10.0
libtpu: 0.0.40
codegen_flags: <defaults>
</compile_context>

<pallas_src>
import functools

import jax
import jax.numpy as jnp
from jax.experimental import pallas as pl
from jax.experimental.pallas import tpu as pltpu

LANE = 128
BF16_SUBLANE = 16  # bf16 packs (16, 128) per vreg -> batch tile multiple of 16


def _round_up(x, m):
    return (x + m - 1) // m * m


def qnet_kernel(x_ref, w_in_ref, b_in_ref, *refs, num_hidden, out_size):
    """One batch tile: input linear -> L hidden linears -> output -> ReLU -> softmax."""
    if num_hidden > 0:
        w_h_ref, b_h_ref, w_out_ref, b_out_ref, o_ref = refs
    else:
        w_out_ref, b_out_ref, o_ref = refs

    # x arrives already bf16 (padded/cast once in the wrapper); MXU accumulates
    # f32, all elementwise work stays f32 (v5e has no bf16 VPU/EUP).
    x = x_ref[...]

    # input linear + ReLU (+ dropout == identity in eval)
    h = jnp.dot(x, w_in_ref[...], preferred_element_type=jnp.float32)
    h = jnp.maximum(h + b_in_ref[...], 0.0)

    # hidden linears + ReLU (+ dropout == identity in eval).  num_hidden is
    # small; static unroll is fine.
    for layer in range(num_hidden):
        h = jnp.dot(h.astype(jnp.bfloat16), w_h_ref[layer],
                    preferred_element_type=jnp.float32)
        h = jnp.maximum(h + b_h_ref[layer], 0.0)

    # output linear + ReLU + softmax(dim=-1)
    logits = jnp.dot(h.astype(jnp.bfloat16), w_out_ref[...],
                     preferred_element_type=jnp.float32)
    logits = jnp.maximum(logits + b_out_ref[...], 0.0)

    # Mask the lane-padding columns AFTER the ReLU so they don't contribute to
    # the softmax (masking via the bias would be clamped by ReLU).
    col = jax.lax.broadcasted_iota(jnp.int32, logits.shape, dimension=1)
    logits = jnp.where(col < out_size, logits, -1e30)

    m = jnp.max(logits, axis=-1, keepdims=True)
    e = jnp.exp(logits - m)
    denom = jnp.sum(e, axis=-1, keepdims=True)
    o_ref[...] = (e * pl.reciprocal(denom, approx=True)).astype(o_ref.dtype)


def prepare_params(params, num_hidden):
    """One-time padding + bf16 cast of the weights (hoisted out of the hot path).

    Zero-padded rows/cols contribute nothing; padded hidden units are
    ReLU(0 + 0) = 0 feeding zero weight columns, so results are exact.
    """
    w_in, b_in, w_h, b_h, w_out, b_out = params
    in_size, hid = w_in.shape
    out_size = w_out.shape[1]

    Fp = _round_up(in_size, LANE)
    Hp = _round_up(hid, LANE)
    Op = _round_up(out_size, LANE)

    f32, bf16 = jnp.float32, jnp.bfloat16

    def pad2(w, r, c):
        return jnp.zeros((r, c), f32).at[:w.shape[0], :w.shape[1]].set(w)

    prepared = {
        "w_in": pad2(w_in, Fp, Hp).astype(bf16),
        "b_in": pad2(b_in, 1, Hp),
        "w_out": pad2(w_out, Hp, Op).astype(bf16),
        "b_out": pad2(b_out, 1, Op),
        "in_size": in_size,
        "out_size": out_size,
        "Fp": Fp, "Hp": Hp, "Op": Op,
        "num_hidden": int(num_hidden),
    }
    if num_hidden > 0:
        L = int(num_hidden)
        prepared["w_h"] = (jnp.zeros((L, Hp, Hp), f32)
                           .at[:, :hid, :hid].set(w_h[:L]).astype(bf16))
        prepared["b_h"] = jnp.zeros((L, 1, Hp), f32).at[:, :, :hid].set(b_h[:L])
    return prepared


def _pick_batch_tile(B):
    if B <= BF16_SUBLANE:
        return BF16_SUBLANE
    # >= 2 grid steps whenever the batch allows it (v7x has 2 TensorCores per
    # chip; "parallel" shards the grid across them), but keep tiles <= 1024 to
    # stay well over the per-step overhead / HBM-roofline knee.
    return min(1024, _round_up(pl.cdiv(B, 2), BF16_SUBLANE))


def linear_qnet_forward(x, prepared):
    """x: (B, inputSize) float -> (B, outputSize) float32 softmax probs."""
    B = x.shape[0]
    in_size = prepared["in_size"]
    out_size = prepared["out_size"]
    Fp, Hp, Op = prepared["Fp"], prepared["Hp"], prepared["Op"]
    num_hidden = prepared["num_hidden"]

    TB = _pick_batch_tile(B)
    Bp = _round_up(B, TB)

    # Activations ship as bf16 (half the batch-scaling HBM->VMEM bytes); x only
    # ever enters the MXU as bf16, so numerics are unchanged.
    xp = jnp.zeros((Bp, Fp), jnp.bfloat16).at[:B, :in_size].set(
        x.astype(jnp.bfloat16))

    kernel = functools.partial(qnet_kernel, num_hidden=num_hidden,
                               out_size=out_size)

    # Weight/bias specs use a constant index_map, so Pallas DMAs them once and
    # keeps them VMEM-resident across grid steps.  At Hp=Op=128 the duplicate
    # double-buffer allocation is ~200 KiB and harmless.
    # TODO(synk): single-buffer them (pipeline_mode=pl.Buffered(1)) if
    # hidden_size grows enough for duplicate weight buffers to matter on v7x.
    in_specs = [
        pl.BlockSpec((TB, Fp), lambda i: (i, 0)),        # x tile (pipelined)
        pl.BlockSpec((Fp, Hp), lambda i: (0, 0)),        # w_in (resident)
        pl.BlockSpec((1, Hp), lambda i: (0, 0)),         # b_in
    ]
    args = [xp, prepared["w_in"], prepared["b_in"]]
    if num_hidden > 0:
        L = prepared["w_h"].shape[0]
        in_specs += [
            pl.BlockSpec((L, Hp, Hp), lambda i: (0, 0, 0)),  # w_h stack
            pl.BlockSpec((L, 1, Hp), lambda i: (0, 0, 0)),   # b_h stack
        ]
        args += [prepared["w_h"], prepared["b_h"]]
    in_specs += [
        pl.BlockSpec((Hp, Op), lambda i: (0, 0)),        # w_out
        pl.BlockSpec((1, Op), lambda i: (0, 0)),         # b_out
    ]
    args += [prepared["w_out"], prepared["b_out"]]

    out_padded = pl.pallas_call(
        kernel,
        out_shape=jax.ShapeDtypeStruct((Bp, Op), jnp.float32),
        grid_spec=pltpu.PrefetchScalarGridSpec(
            num_scalar_prefetch=0,
            grid=(Bp // TB,),
            in_specs=in_specs,
            out_specs=pl.BlockSpec((TB, Op), lambda i: (i, 0)),  # lane-dense vst
        ),
        compiler_params=pltpu.CompilerParams(
            dimension_semantics=("parallel",),      # megacore on v7x
            vmem_limit_bytes=32 * 1024 * 1024,      # fits v7x's 64 MiB VMEM
        ),
    )(*args)

    return out_padded[:B, :out_size]


def init_params(key, input_size, hidden_size, output_size, num_hidden):
    """Deterministic init mimicking PyTorch Linear shapes (stored transposed)."""
    ks = jax.random.split(key, 6)

    def uniform(k, shape, fan_in):
        bound = 1.0 / jnp.sqrt(jnp.float32(fan_in))
        return jax.random.uniform(k, shape, jnp.float32, -bound, bound)

    # PyTorch stores W as (out, in); we store transposed (in, out).
    w_in = uniform(ks[0], (input_size, hidden_size), input_size)
    b_in = uniform(ks[1], (1, hidden_size), input_size)
    L = max(int(num_hidden), 1)  # non-empty array even if no hidden layers
    w_h = uniform(ks[2], (L, hidden_size, hidden_size), hidden_size)
    b_h = uniform(ks[3], (L, 1, hidden_size), hidden_size)
    w_out = uniform(ks[4], (hidden_size, output_size), hidden_size)
    b_out = uniform(ks[5], (1, output_size), hidden_size)
    return (w_in, b_in, w_h, b_h, w_out, b_out)


def reference_forward(x, params, num_hidden):
    """Pure-JAX f32 reference matching the PyTorch forward (eval-mode dropout)."""
    w_in, b_in, w_h, b_h, w_out, b_out = params
    h = jnp.maximum(x @ w_in + b_in, 0.0)
    for layer in range(num_hidden):
        h = jnp.maximum(h @ w_h[layer] + b_h[layer], 0.0)
    logits = jnp.maximum(h @ w_out + b_out, 0.0)
    return jax.nn.softmax(logits, axis=-1)


if __name__ == "__main__":
    batch = 8
    input_size = 16
    hidden_size = 32
    output_size = 4
    num_hidden_layers = 2

    key = jax.random.PRNGKey(0)
    k_x, k_p = jax.random.split(key)
    x = jax.random.normal(k_x, (batch, input_size), dtype=jnp.float32)
    params = init_params(k_p, input_size, hidden_size, output_size,
                         num_hidden_layers)

    # One-time parameter prep (padding + bf16 cast) — hoisted out of the
    # per-call path per the perf review.
    prepared = jax.tree_util.tree_map(
        lambda a: jax.block_until_ready(a) if isinstance(a, jax.Array) else a,
        prepare_params(params, num_hidden_layers))

    out = jax.block_until_ready(linear_qnet_forward(x, prepared))
    ref = reference_forward(x, params, num_hidden_layers)

    assert out.shape == (batch, output_size)
    # bf16 MXU operands (f32 accumulate) => slightly looser tolerance vs the
    # pure-f32 reference.
    assert jnp.allclose(out, ref, atol=2e-2), float(jnp.max(jnp.abs(out - ref)))
    # softmax rows sum to 1 (approx reciprocal => tiny slack)
    assert jnp.allclose(jnp.sum(out, axis=-1), 1.0, atol=5e-3)

    # Exercise the num_hidden == 0 path too (dummy hidden stack skipped).
    prepared0 = prepare_params(params, 0)
    out0 = jax.block_until_ready(linear_qnet_forward(x, prepared0))
    ref0 = reference_forward(x, params, 0)
    assert jnp.allclose(out0, ref0, atol=2e-2)

    print("KERNEL_OK")
</pallas_src>

<mosaic_0001>
module attributes {stable_mosaic.version = 11 : i64} {
  func.func @qnet_kernel(%arg0: i32, %arg1: memref<16x128xbf16, #tpu.memory_space<vmem>>, %arg2: memref<128x128xbf16, #tpu.memory_space<vmem>>, %arg3: memref<1x128xf32, #tpu.memory_space<vmem>>, %arg4: memref<2x128x128xbf16, #tpu.memory_space<vmem>>, %arg5: memref<2x1x128xf32, #tpu.memory_space<vmem>>, %arg6: memref<128x128xbf16, #tpu.memory_space<vmem>>, %arg7: memref<1x128xf32, #tpu.memory_space<vmem>>, %arg8: memref<16x128xf32, #tpu.memory_space<vmem>>) attributes {dimension_semantics = [#tpu.dimension_semantics<parallel>], iteration_bounds = array<i64: 1>, scalar_prefetch = 0 : i64, scratch_operands = 0 : i64, tpu.core_type = #tpu.core_type<tc>, window_params = [{transform_indices = @transform_0, window_bounds = array<i64: 16, 128>}, {pipeline_mode = #tpu.pipeline_mode<synchronous>, transform_indices = @transform_1, window_bounds = array<i64: 128, 128>}, {pipeline_mode = #tpu.pipeline_mode<synchronous>, transform_indices = @transform_2, window_bounds = array<i64: 1, 128>}, {pipeline_mode = #tpu.pipeline_mode<synchronous>, transform_indices = @transform_3, window_bounds = array<i64: 2, 128, 128>}, {pipeline_mode = #tpu.pipeline_mode<synchronous>, transform_indices = @transform_4, window_bounds = array<i64: 2, 1, 128>}, {pipeline_mode = #tpu.pipeline_mode<synchronous>, transform_indices = @transform_5, window_bounds = array<i64: 128, 128>}, {pipeline_mode = #tpu.pipeline_mode<synchronous>, transform_indices = @transform_6, window_bounds = array<i64: 1, 128>}, {transform_indices = @transform_7, window_bounds = array<i64: 16, 128>}]} {
    %c0 = arith.constant 0 : index
    %c0_0 = arith.constant 0 : index
    %0 = vector.load %arg1[%c0, %c0_0] : memref<16x128xbf16, #tpu.memory_space<vmem>>, vector<16x128xbf16>
    %c0_1 = arith.constant 0 : index
    %c0_2 = arith.constant 0 : index
    %1 = vector.load %arg2[%c0_1, %c0_2] : memref<128x128xbf16, #tpu.memory_space<vmem>>, vector<128x128xbf16>
    %cst = arith.constant dense<0.000000e+00> : vector<16x128xf32>
    %2 = tpu.matmul %0, %1, %cst {dimension_numbers = #tpu.dot_dimension_numbers<[1], [0], [0], [1], [0, 0, 1, 1], [], []>} : vector<16x128xbf16>, vector<128x128xbf16>, vector<16x128xf32> -> vector<16x128xf32>
    %c0_3 = arith.constant 0 : index
    %c0_4 = arith.constant 0 : index
    %3 = vector.load %arg3[%c0_3, %c0_4] : memref<1x128xf32, #tpu.memory_space<vmem>>, vector<1x128xf32>
    %4 = vector.broadcast %3 : vector<1x128xf32> to vector<16x128xf32>
    %5 = arith.addf %2, %4 : vector<16x128xf32>
    %cst_5 = arith.constant 0.000000e+00 : f32
    %6 = vector.broadcast %cst_5 : f32 to vector<16x128xf32>
    %7 = arith.maximumf %5, %6 : vector<16x128xf32>
    %8 = arith.truncf %7 : vector<16x128xf32> to vector<16x128xbf16>
    %c0_6 = arith.constant 0 : index
    %c0_7 = arith.constant 0 : index
    %c0_8 = arith.constant 0 : index
    %9 = vector.load %arg4[%c0_6, %c0_7, %c0_8] : memref<2x128x128xbf16, #tpu.memory_space<vmem>>, vector<1x128x128xbf16>
    %10 = vector.shape_cast %9 : vector<1x128x128xbf16> to vector<128x128xbf16>
    %cst_9 = arith.constant dense<0.000000e+00> : vector<16x128xf32>
    %11 = tpu.matmul %8, %10, %cst_9 {dimension_numbers = #tpu.dot_dimension_numbers<[1], [0], [0], [1], [0, 0, 1, 1], [], []>} : vector<16x128xbf16>, vector<128x128xbf16>, vector<16x128xf32> -> vector<16x128xf32>
    %c0_10 = arith.constant 0 : index
    %c0_11 = arith.constant 0 : index
    %c0_12 = arith.constant 0 : index
    %12 = vector.load %arg5[%c0_10, %c0_11, %c0_12] : memref<2x1x128xf32, #tpu.memory_space<vmem>>, vector<1x1x128xf32>
    %13 = vector.shape_cast %12 : vector<1x1x128xf32> to vector<1x128xf32>
    %14 = vector.broadcast %13 : vector<1x128xf32> to vector<16x128xf32>
    %15 = arith.addf %11, %14 : vector<16x128xf32>
    %cst_13 = arith.constant 0.000000e+00 : f32
    %16 = vector.broadcast %cst_13 : f32 to vector<16x128xf32>
    %17 = arith.maximumf %15, %16 : vector<16x128xf32>
    %18 = arith.truncf %17 : vector<16x128xf32> to vector<16x128xbf16>
    %c1 = arith.constant 1 : index
    %c0_14 = arith.constant 0 : index
    %c0_15 = arith.constant 0 : index
    %19 = vector.load %arg4[%c1, %c0_14, %c0_15] : memref<2x128x128xbf16, #tpu.memory_space<vmem>>, vector<1x128x128xbf16>
    %20 = vector.shape_cast %19 : vector<1x128x128xbf16> to vector<128x128xbf16>
    %cst_16 = arith.constant dense<0.000000e+00> : vector<16x128xf32>
    %21 = tpu.matmul %18, %20, %cst_16 {dimension_numbers = #tpu.dot_dimension_numbers<[1], [0], [0], [1], [0, 0, 1, 1], [], []>} : vector<16x128xbf16>, vector<128x128xbf16>, vector<16x128xf32> -> vector<16x128xf32>
    %c1_17 = arith.constant 1 : index
    %c0_18 = arith.constant 0 : index
    %c0_19 = arith.constant 0 : index
    %22 = vector.load %arg5[%c1_17, %c0_18, %c0_19] : memref<2x1x128xf32, #tpu.memory_space<vmem>>, vector<1x1x128xf32>
    %23 = vector.shape_cast %22 : vector<1x1x128xf32> to vector<1x128xf32>
    %24 = vector.broadcast %23 : vector<1x128xf32> to vector<16x128xf32>
    %25 = arith.addf %21, %24 : vector<16x128xf32>
    %cst_20 = arith.constant 0.000000e+00 : f32
    %26 = vector.broadcast %cst_20 : f32 to vector<16x128xf32>
    %27 = arith.maximumf %25, %26 : vector<16x128xf32>
    %28 = arith.truncf %27 : vector<16x128xf32> to vector<16x128xbf16>
    %c0_21 = arith.constant 0 : index
    %c0_22 = arith.constant 0 : index
    %29 = vector.load %arg6[%c0_21, %c0_22] : memref<128x128xbf16, #tpu.memory_space<vmem>>, vector<128x128xbf16>
    %cst_23 = arith.constant dense<0.000000e+00> : vector<16x128xf32>
    %30 = tpu.matmul %28, %29, %cst_23 {dimension_numbers = #tpu.dot_dimension_numbers<[1], [0], [0], [1], [0, 0, 1, 1], [], []>} : vector<16x128xbf16>, vector<128x128xbf16>, vector<16x128xf32> -> vector<16x128xf32>
    %c0_24 = arith.constant 0 : index
    %c0_25 = arith.constant 0 : index
    %31 = vector.load %arg7[%c0_24, %c0_25] : memref<1x128xf32, #tpu.memory_space<vmem>>, vector<1x128xf32>
    %32 = vector.broadcast %31 : vector<1x128xf32> to vector<16x128xf32>
    %33 = arith.addf %30, %32 : vector<16x128xf32>
    %cst_26 = arith.constant 0.000000e+00 : f32
    %34 = vector.broadcast %cst_26 : f32 to vector<16x128xf32>
    %35 = arith.maximumf %33, %34 : vector<16x128xf32>
    %36 = tpu.iota {dimensions = array<i32: 1>} : vector<16x128xi32>
    %c4_i32 = arith.constant 4 : i32
    %37 = vector.broadcast %c4_i32 : i32 to vector<16x128xi32>
    %38 = arith.cmpi slt, %36, %37 : vector<16x128xi32>
    %cst_27 = arith.constant -1.000000e+30 : f32
    %39 = vector.broadcast %cst_27 : f32 to vector<16x128xf32>
    %40 = arith.select %38, %35, %39 : vector<16x128xi1>, vector<16x128xf32>
    %cst_28 = arith.constant dense<0xFF800000> : vector<16xf32>
    %41 = vector.multi_reduction <maximumf>, %40, %cst_28 [1] : vector<16x128xf32> to vector<16xf32>
    %42 = vector.shape_cast %41 : vector<16xf32> to vector<16x1xf32>
    %43 = vector.broadcast %42 : vector<16x1xf32> to vector<16x128xf32>
    %44 = arith.subf %40, %43 : vector<16x128xf32>
    %45 = math.exp %44 : vector<16x128xf32>
    %cst_29 = arith.constant dense<0.000000e+00> : vector<16xf32>
    %46 = vector.multi_reduction <add>, %45, %cst_29 [1] : vector<16x128xf32> to vector<16xf32>
    %47 = vector.shape_cast %46 : vector<16xf32> to vector<16x1xf32>
    %48 = tpu.reciprocal %47 {approx = true} : vector<16x1xf32> -> vector<16x1xf32>
    %49 = vector.broadcast %48 : vector<16x1xf32> to vector<16x128xf32>
    %50 = arith.mulf %45, %49 : vector<16x128xf32>
    %c0_30 = arith.constant 0 : index
    %c0_31 = arith.constant 0 : index
    %51 = vector.load %arg8[%c0_30, %c0_31] : memref<16x128xf32, #tpu.memory_space<vmem>>, vector<16x128xf32>
    tpu.vector_store %arg8[%c0_30, %c0_31], %50 {strides = array<i32>} : memref<16x128xf32, #tpu.memory_space<vmem>>, vector<16x128xf32>,
    return
  }
  func.func @transform_0(%arg0: i32) -> (i32, i32) {
    %c0_i32 = arith.constant 0 : i32
    %c0_i32_0 = arith.constant 0 : i32
    return %arg0, %c0_i32 : i32, i32
  }
  func.func @transform_1(%arg0: i32) -> (i32, i32) {
    %c0_i32 = arith.constant 0 : i32
    %c0_i32_0 = arith.constant 0 : i32
    %c0_i32_1 = arith.constant 0 : i32
    return %c0_i32, %c0_i32_0 : i32, i32
  }
  func.func @transform_2(%arg0: i32) -> (i32, i32) {
    %c0_i32 = arith.constant 0 : i32
    %c0_i32_0 = arith.constant 0 : i32
    %c0_i32_1 = arith.constant 0 : i32
    return %c0_i32, %c0_i32_0 : i32, i32
  }
  func.func @transform_3(%arg0: i32) -> (i32, i32, i32) {
    %c0_i32 = arith.constant 0 : i32
    %c0_i32_0 = arith.constant 0 : i32
    %c0_i32_1 = arith.constant 0 : i32
    %c0_i32_2 = arith.constant 0 : i32
    return %c0_i32, %c0_i32_0, %c0_i32_1 : i32, i32, i32
  }
  func.func @transform_4(%arg0: i32) -> (i32, i32, i32) {
    %c0_i32 = arith.constant 0 : i32
    %c0_i32_0 = arith.constant 0 : i32
    %c0_i32_1 = arith.constant 0 : i32
    %c0_i32_2 = arith.constant 0 : i32
    return %c0_i32, %c0_i32_0, %c0_i32_1 : i32, i32, i32
  }
  func.func @transform_5(%arg0: i32) -> (i32, i32) {
    %c0_i32 = arith.constant 0 : i32
    %c0_i32_0 = arith.constant 0 : i32
    %c0_i32_1 = arith.constant 0 : i32
    return %c0_i32, %c0_i32_0 : i32, i32
  }
  func.func @transform_6(%arg0: i32) -> (i32, i32) {
    %c0_i32 = arith.constant 0 : i32
    %c0_i32_0 = arith.constant 0 : i32
    %c0_i32_1 = arith.constant 0 : i32
    return %c0_i32, %c0_i32_0 : i32, i32
  }
  func.func @transform_7(%arg0: i32) -> (i32, i32) {
    %c0_i32 = arith.constant 0 : i32
    %c0_i32_0 = arith.constant 0 : i32
    return %arg0, %c0_i32 : i32, i32
  }
}

</mosaic_0001>

<llo_original>
// kernel: tpu_custom_call.1
$region0: #{tpu_custom_call.1}
  #allocation0 [shape = 'u32[]', space=smem, size = 0x4, offset = 0x4, fixed_abs, tag = 'smem constant byte address 0x4 - core index']
  #allocation1 [shape = 'u32[144,128]{1,0:T(1,128)}', space=vmem, size = 0x12000, scoped, tag = 'internal scratch']
  %s0 = inlined_call_operand.hbm [shape: bf16[16,128], index: 0, kind: input, shape index: {}]
  %s1 = inlined_call_operand.hbm [shape: bf16[128,128], index: 1, kind: input, shape index: {}]
  %s2 = inlined_call_operand.vmem [shape: f32[1,128], index: 2, kind: input, shape index: {}]
  %s3 = inlined_call_operand.hbm [shape: bf16[2,128,128], index: 3, kind: input, shape index: {}]
  %s4 = inlined_call_operand.vmem [shape: f32[2,1,128], index: 4, kind: input, shape index: {}]
  %s5 = inlined_call_operand.hbm [shape: bf16[128,128], index: 5, kind: input, shape index: {}]
  %s6 = inlined_call_operand.vmem [shape: f32[1,128], index: 6, kind: input, shape index: {}]
  %s7 = inlined_call_operand.hbm [shape: f32[16,128], index: 7, kind: output, shape index: {}]
  %s8 = sld [smem:[#allocation0]]
  $region54: #{tpu_custom_call.1} parent=0
    _
  %s10 = ssub.s32 1, %s8
  %s11 = scalar_select 0, %s10, %s8
  $region1: #{tpu_custom_call.1} parent=0
    #allocation2 [shape = 'u8[4096]{0}', space=vmem, size = 0x1000, scoped, tag = 'input window, operand 0, single buffered']
    #allocation3 [shape = 's32[1]{0}', space=sflag, size = 0x4, scoped, tag = 'scoped memory for tpu_custom_call.1']
    #allocation4 [shape = 's32[1]{0}', space=sflag, size = 0x4, scoped, tag = 'scoped memory for tpu_custom_call.1']
    #allocation5 [shape = 'u8[32768]{0}', space=vmem, size = 0x8000, scoped, tag = 'input window, operand 1, single buffered']
    #allocation6 [shape = 's32[1]{0}', space=sflag, size = 0x4, scoped, tag = 'scoped memory for tpu_custom_call.1']
    #allocation7 [shape = 'u8[65536]{0}', space=vmem, size = 0x10000, scoped, tag = 'input window, operand 3, single buffered']
    #allocation8 [shape = 'u8[32768]{0}', space=vmem, size = 0x8000, scoped, tag = 'input window, operand 5, single buffered']
    #allocation9 [shape = 's32[1]{0}', space=sflag, size = 0x4, scoped, tag = 'scoped memory for tpu_custom_call.1']
    #allocation10 [shape = 'u8[8192]{0}', space=vmem, size = 0x2000, scoped, tag = 'output window, operand 0, single buffered']
    %12 = vsyncpa [#allocation3], 0
    %13 = vsyncpa [#allocation6], 0
    %14 = vsyncpa [#allocation9], 0
    %15 = vsyncpa [#allocation4], 0
    // Predicated region
    $region2: #{tpu_custom_call.1} parent=1 // pred_check
      _
    $region3: #{tpu_custom_call.1} parent=1 // pred_check_branch
      %17 = sbr.rel (0) target = $region5
    $region4: #{tpu_custom_call.1} parent=1 // pred_region
      %s19 = ssub.s32 128, 128
      %20 = vsyncadd [#allocation3], %s19
      %s21 = sshll.u32 [#allocation2], 4
      %s22 = int_to_ptr.vmem [resolvable:$true] %s21
      %27 = dma.hbm_to_vmem [thread:$0]  %s0, 128, %s22, [#allocation3], 64, 64, 4
    $region5: #{tpu_custom_call.1} parent=1 // pred_fallthru
      _
    // Predicated region
    $region6: #{tpu_custom_call.1} parent=1 // pred_check
      _
    $region7: #{tpu_custom_call.1} parent=1 // pred_check_branch
      %29 = sbr.rel (0) target = $region9
    $region8: #{tpu_custom_call.1} parent=1 // pred_region
      %s31 = ssub.s32 1024, 1024
      %32 = vsyncadd [#allocation6], %s31
      %s33 = sshll.u32 [#allocation5], 4
      %s34 = int_to_ptr.vmem [resolvable:$true] %s33
      %39 = dma.hbm_to_vmem [thread:$0]  %s1, 1024, %s34, [#allocation6], 64, 64, 4
    $region9: #{tpu_custom_call.1} parent=1 // pred_fallthru
      _
    // Predicated region
    $region10: #{tpu_custom_call.1} parent=1 // pred_check
      _
    $region11: #{tpu_custom_call.1} parent=1 // pred_check_branch
      %41 = sbr.rel (0) target = $region13
    $region12: #{tpu_custom_call.1} parent=1 // pred_region
      _
    $region13: #{tpu_custom_call.1} parent=1 // pred_fallthru
      _
    // Predicated region
    $region14: #{tpu_custom_call.1} parent=1 // pred_check
      _
    $region15: #{tpu_custom_call.1} parent=1 // pred_check_branch
      %43 = sbr.rel (0) target = $region17
    $region16: #{tpu_custom_call.1} parent=1 // pred_region
      %s45 = ssub.s32 2048, 2048
      %46 = vsyncadd [#allocation6], %s45
      %s47 = sshll.u32 [#allocation7], 4
      %s48 = int_to_ptr.vmem [resolvable:$true] %s47
      %53 = dma.hbm_to_vmem [thread:$0]  %s3, 2048, %s48, [#allocation6], 64, 64, 4
    $region17: #{tpu_custom_call.1} parent=1 // pred_fallthru
      _
    // Predicated region
    $region18: #{tpu_custom_call.1} parent=1 // pred_check
      _
    $region19: #{tpu_custom_call.1} parent=1 // pred_check_branch
      %55 = sbr.rel (0) target = $region21
    $region20: #{tpu_custom_call.1} parent=1 // pred_region
      _
    $region21: #{tpu_custom_call.1} parent=1 // pred_fallthru
      _
    // Predicated region
    $region22: #{tpu_custom_call.1} parent=1 // pred_check
      _
    $region23: #{tpu_custom_call.1} parent=1 // pred_check_branch
      %57 = sbr.rel (0) target = $region25
    $region24: #{tpu_custom_call.1} parent=1 // pred_region
      %s59 = ssub.s32 1024, 1024
      %60 = vsyncadd [#allocation9], %s59
      %s61 = sshll.u32 [#allocation8], 4
      %s62 = int_to_ptr.vmem [resolvable:$true] %s61
      %67 = dma.hbm_to_vmem [thread:$0]  %s5, 1024, %s62, [#allocation9], 64, 64, 4
    $region25: #{tpu_custom_call.1} parent=1 // pred_fallthru
      _
    // Predicated region
    $region26: #{tpu_custom_call.1} parent=1 // pred_check
      _
    $region27: #{tpu_custom_call.1} parent=1 // pred_check_branch
      %69 = sbr.rel (0) target = $region29
    $region28: #{tpu_custom_call.1} parent=1 // pred_region
      _
    $region29: #{tpu_custom_call.1} parent=1 // pred_fallthru
      _
    // Predicated region
    $region30: #{tpu_custom_call.1} parent=1 // pred_check
      _
    $region31: #{tpu_custom_call.1} parent=1 // pred_check_branch
      %71 = sbr.rel (0) target = $region33
    $region32: #{tpu_custom_call.1} parent=1 // pred_region
      %72 = dma.done [#allocation3], 128
    $region33: #{tpu_custom_call.1} parent=1 // pred_fallthru
      _
    // Predicated region
    $region34: #{tpu_custom_call.1} parent=1 // pred_check
      _
    $region35: #{tpu_custom_call.1} parent=1 // pred_check_branch
      %74 = sbr.rel (0) target = $region37
    $region36: #{tpu_custom_call.1} parent=1 // pred_region
      %75 = dma.done [#allocation6], 1024
    $region37: #{tpu_custom_call.1} parent=1 // pred_fallthru
      _
    // Predicated region
    $region38: #{tpu_custom_call.1} parent=1 // pred_check
      _
    $region39: #{tpu_custom_call.1} parent=1 // pred_check_branch
      %77 = sbr.rel (0) target = $region41
    $region40: #{tpu_custom_call.1} parent=1 // pred_region
      %78 = dma.done [#allocation6], 2048
    $region41: #{tpu_custom_call.1} parent=1 // pred_fallthru
      _
    // Predicated region
    $region42: #{tpu_custom_call.1} parent=1 // pred_check
      _
    $region43: #{tpu_custom_call.1} parent=1 // pred_check_branch
      %80 = sbr.rel (0) target = $region45
    $region44: #{tpu_custom_call.1} parent=1 // pred_region
      %81 = dma.done [#allocation9], 1024
    $region45: #{tpu_custom_call.1} parent=1 // pred_fallthru
      _
    %v83 = vld [vmem:[#allocation2] sm:$0xf]
    %v84 = vld [vmem:[#allocation2 + $0x4] sm:$0xf]
    %v85 = vld [vmem:[#allocation5] sm:$0xf]
    %v86 = vld [vmem:[#allocation5 + $0x4] sm:$0xf]
    %v87 = vld [vmem:[#allocation5 + $0x8] sm:$0xf]
    %v88 = vld [vmem:[#allocation5 + $0xc] sm:$0xf]
    %v89 = vld [vmem:[#allocation5 + $0x10] sm:$0xf]
    %v90 = vld [vmem:[#allocation5 + $0x14] sm:$0xf]
    %v91 = vld [vmem:[#allocation5 + $0x18] sm:$0xf]
    %v92 = vld [vmem:[#allocation5 + $0x1c] sm:$0xf]
    %v93 = vld [vmem:[#allocation5 + $0x20] sm:$0xf]
    %v94 = vld [vmem:[#allocation5 + $0x24] sm:$0xf]
    %v95 = vld [vmem:[#allocation5 + $0x28] sm:$0xf]
    %v96 = vld [vmem:[#allocation5 + $0x2c] sm:$0xf]
    %v97 = vld [vmem:[#allocation5 + $0x30] sm:$0xf]
    %v98 = vld [vmem:[#allocation5 + $0x34] sm:$0xf]
    %v99 = vld [vmem:[#allocation5 + $0x38] sm:$0xf]
    %v100 = vld [vmem:[#allocation5 + $0x3c] sm:$0xf]
    %v101 = vld [vmem:[%s2] sm:$0x1]
    %v103 = vlaneseq
    %v104 = vshrl.u32 %v103, 7
    %v105 = vsub.s32 0, %v104
    %v106 = vrot.slane %v101, %v105
    %v110 = vunpack.c.l.b16 %v83
    %v111 = vunpack.c.l.b16 %v84
    %v112 = vpack.c.b16 %v111, %v110
    %v130 = vunpack.c.l.b16 %v85
    %v131 = vunpack.c.l.b16 %v86
    %v132 = vunpack.c.l.b16 %v87
    %v133 = vunpack.c.l.b16 %v88
    %v134 = vunpack.c.l.b16 %v89
    %v135 = vunpack.c.l.b16 %v90
    %v136 = vunpack.c.l.b16 %v91
    %v137 = vunpack.c.l.b16 %v92
    %v138 = vunpack.c.l.b16 %v93
    %v139 = vunpack.c.l.b16 %v94
    %v140 = vunpack.c.l.b16 %v95
    %v141 = vunpack.c.l.b16 %v96
    %v142 = vunpack.c.l.b16 %v97
    %v143 = vunpack.c.l.b16 %v98
    %v144 = vunpack.c.l.b16 %v99
    %v145 = vunpack.c.l.b16 %v100
    %v146 = vpack.c.b16 %v131, %v130
    %v147 = vpack.c.b16 %v133, %v132
    %v148 = vpack.c.b16 %v135, %v134
    %v149 = vpack.c.b16 %v137, %v136
    %v150 = vpack.c.b16 %v139, %v138
    %v151 = vpack.c.b16 %v141, %v140
    %v152 = vpack.c.b16 %v143, %v142
    %v153 = vpack.c.b16 %v145, %v144
    %162 = vmatprep.subr.bf16.mxu0 0
    %163 = vmatpush1.bf16.msra.mxu0 %v146
    %164 = vmatprep.subr.bf16.mxu0 0
    %165 = vmatpush1.bf16.msra.mxu0 %v147
    %166 = vmatprep.subr.bf16.mxu0 0
    %167 = vmatpush1.bf16.msra.mxu0 %v148
    %168 = vmatprep.subr.bf16.mxu0 0
    %169 = vmatpush1.bf16.msra.mxu0 %v149
    %170 = vmatprep.subr.bf16.mxu0 0
    %171 = vmatpush1.bf16.msra.mxu0 %v150
    %172 = vmatprep.subr.bf16.mxu0 0
    %173 = vmatpush1.bf16.msra.mxu0 %v151
    %174 = vmatprep.subr.bf16.mxu0 0
    %175 = vmatpush1.bf16.msra.mxu0 %v152
    %176 = vmatprep.subr.bf16.mxu0 0
    %177 = vmatpush1.bf16.msra.mxu0 %v153
    %178 = vmatprep.subr.bf16.mxu0 0
    %179 = vmatpush1.bf16.msra.mxu0 0
    %180 = vmatprep.subr.bf16.mxu0 0
    %181 = vmatpush1.bf16.msra.mxu0 0
    %182 = vmatprep.subr.bf16.mxu0 0
    %183 = vmatpush1.bf16.msra.mxu0 0
    %184 = vmatprep.subr.bf16.mxu0 0
    %185 = vmatpush1.bf16.msra.mxu0 0
    %186 = vmatprep.subr.bf16.mxu0 0
    %187 = vmatpush1.bf16.msra.mxu0 0
    %188 = vmatprep.subr.bf16.mxu0 0
    %189 = vmatpush1.bf16.msra.mxu0 0
    %190 = vmatprep.subr.bf16.mxu0 0
    %191 = vmatpush1.bf16.msra.mxu0 0
    %192 = vmatprep.subr.bf16.mxu0 0
    %193 = vmatpush1.bf16.msra.mxu0 0
    %194 = vmatprep.mubr.bf16.mxu0 0
    %195 = vmatmul.mubr.bf16.gmra.mrb[0].mxu0 %v112
    %v196 = vpop.f32.mrb[0].mxu0
    %v197 = vadd.f32 %v106, %v196
    %v198 = vpop.f32.mrb[0].mxu0
    %v199 = vpop.f32.mrb[0].mxu0
    %v200 = vadd.f32 %v106, %v199
    %v201 = vpop.f32.mrb[0].mxu0
    %202 = vdwg.mxu0
    %v203 = vmax.f32 %v197, 0.0
    %v204 = vmax.f32 %v200, 0.0
    %v205 = vpack.c.bf16 %v204, %v203
    %v206 = vld [vmem:[#allocation7] sm:$0xf]
    %v207 = vld [vmem:[#allocation7 + $0x4] sm:$0xf]
    %v208 = vld [vmem:[#allocation7 + $0x8] sm:$0xf]
    %v209 = vld [vmem:[#allocation7 + $0xc] sm:$0xf]
    %v210 = vld [vmem:[#allocation7 + $0x10] sm:$0xf]
    %v211 = vld [vmem:[#allocation7 + $0x14] sm:$0xf]
    %v212 = vld [vmem:[#allocation7 + $0x18] sm:$0xf]
    %v213 = vld [vmem:[#allocation7 + $0x1c] sm:$0xf]
    %v214 = vld [vmem:[#allocation7 + $0x20] sm:$0xf]
    %v215 = vld [vmem:[#allocation7 + $0x24] sm:$0xf]
    %v216 = vld [vmem:[#allocation7 + $0x28] sm:$0xf]
    %v217 = vld [vmem:[#allocation7 + $0x2c] sm:$0xf]
    %v218 = vld [vmem:[#allocation7 + $0x30] sm:$0xf]
    %v219 = vld [vmem:[#allocation7 + $0x34] sm:$0xf]
    %v220 = vld [vmem:[#allocation7 + $0x38] sm:$0xf]
    %v221 = vld [vmem:[#allocation7 + $0x3c] sm:$0xf]
    %v222 = vld [vmem:[%s4] sm:$0x1]
    %v224 = vlaneseq
    %v225 = vshrl.u32 %v224, 7
    %v226 = vsub.s32 0, %v225
    %v227 = vrot.slane %v222, %v226
    %v245 = vunpack.c.l.b16 %v206
    %v246 = vunpack.c.l.b16 %v207
    %v247 = vunpack.c.l.b16 %v208
    %v248 = vunpack.c.l.b16 %v209
    %v249 = vunpack.c.l.b16 %v210
    %v250 = vunpack.c.l.b16 %v211
    %v251 = vunpack.c.l.b16 %v212
    %v252 = vunpack.c.l.b16 %v213
    %v253 = vunpack.c.l.b16 %v214
    %v254 = vunpack.c.l.b16 %v215
    %v255 = vunpack.c.l.b16 %v216
    %v256 = vunpack.c.l.b16 %v217
    %v257 = vunpack.c.l.b16 %v218
    %v258 = vunpack.c.l.b16 %v219
    %v259 = vunpack.c.l.b16 %v220
    %v260 = vunpack.c.l.b16 %v221
    %v261 = vpack.c.b16 %v246, %v245
    %v262 = vpack.c.b16 %v248, %v247
    %v263 = vpack.c.b16 %v250, %v249
    %v264 = vpack.c.b16 %v252, %v251
    %v265 = vpack.c.b16 %v254, %v253
    %v266 = vpack.c.b16 %v256, %v255
    %v267 = vpack.c.b16 %v258, %v257
    %v268 = vpack.c.b16 %v260, %v259
    %277 = vmatprep.subr.bf16.mxu0 0
    %278 = vmatpush1.bf16.msra.mxu0 %v261
    %279 = vmatprep.subr.bf16.mxu0 0
    %280 = vmatpush1.bf16.msra.mxu0 %v262
    %281 = vmatprep.subr.bf16.mxu0 0
    %282 = vmatpush1.bf16.msra.mxu0 %v263
    %283 = vmatprep.subr.bf16.mxu0 0
    %284 = vmatpush1.bf16.msra.mxu0 %v264
    %285 = vmatprep.subr.bf16.mxu0 0
    %286 = vmatpush1.bf16.msra.mxu0 %v265
    %287 = vmatprep.subr.bf16.mxu0 0
    %288 = vmatpush1.bf16.msra.mxu0 %v266
    %289 = vmatprep.subr.bf16.mxu0 0
    %290 = vmatpush1.bf16.msra.mxu0 %v267
    %291 = vmatprep.subr.bf16.mxu0 0
    %292 = vmatpush1.bf16.msra.mxu0 %v268
    %293 = vmatprep.subr.bf16.mxu0 0
    %294 = vmatpush1.bf16.msra.mxu0 0
    %295 = vmatprep.subr.bf16.mxu0 0
    %296 = vmatpush1.bf16.msra.mxu0 0
    %297 = vmatprep.subr.bf16.mxu0 0
    %298 = vmatpush1.bf16.msra.mxu0 0
    %299 = vmatprep.subr.bf16.mxu0 0
    %300 = vmatpush1.bf16.msra.mxu0 0
    %301 = vmatprep.subr.bf16.mxu0 0
    %302 = vmatpush1.bf16.msra.mxu0 0
    %303 = vmatprep.subr.bf16.mxu0 0
    %304 = vmatpush1.bf16.msra.mxu0 0
    %305 = vmatprep.subr.bf16.mxu0 0
    %306 = vmatpush1.bf16.msra.mxu0 0
    %307 = vmatprep.subr.bf16.mxu0 0
    %308 = vmatpush1.bf16.msra.mxu0 0
    %309 = vmatprep.mubr.bf16.mxu0 0
    %310 = vmatmul.mubr.bf16.gmra.mrb[0].mxu0 %v205
    %v311 = vpop.f32.mrb[0].mxu0
    %v312 = vadd.f32 %v227, %v311
    %v313 = vpop.f32.mrb[0].mxu0
    %v314 = vpop.f32.mrb[0].mxu0
    %v315 = vadd.f32 %v227, %v314
    %v316 = vpop.f32.mrb[0].mxu0
    %317 = vdwg.mxu0
    %v318 = vmax.f32 %v312, 0.0
    %v319 = vmax.f32 %v315, 0.0
    %v320 = vpack.c.bf16 %v319, %v318
    %s321 = scalar_lea.vmem [#allocation7], 64
    %v322 = vld [vmem:[%s321] sm:$0xf]
    %v323 = vld [vmem:[%s321 + $0x4] sm:$0xf]
    %v324 = vld [vmem:[%s321 + $0x8] sm:$0xf]
    %v325 = vld [vmem:[%s321 + $0xc] sm:$0xf]
    %v326 = vld [vmem:[%s321 + $0x10] sm:$0xf]
    %v327 = vld [vmem:[%s321 + $0x14] sm:$0xf]
    %v328 = vld [vmem:[%s321 + $0x18] sm:$0xf]
    %v329 = vld [vmem:[%s321 + $0x1c] sm:$0xf]
    %v330 = vld [vmem:[%s321 + $0x20] sm:$0xf]
    %v331 = vld [vmem:[%s321 + $0x24] sm:$0xf]
    %v332 = vld [vmem:[%s321 + $0x28] sm:$0xf]
    %v333 = vld [vmem:[%s321 + $0x2c] sm:$0xf]
    %v334 = vld [vmem:[%s321 + $0x30] sm:$0xf]
    %v335 = vld [vmem:[%s321 + $0x34] sm:$0xf]
    %v336 = vld [vmem:[%s321 + $0x38] sm:$0xf]
    %v337 = vld [vmem:[%s321 + $0x3c] sm:$0xf]
    %s338 = scalar_lea.vmem %s4, 1
    %v339 = vld [vmem:[%s338] sm:$0x1]
    %v341 = vlaneseq
    %v342 = vshrl.u32 %v341, 7
    %v343 = vsub.s32 0, %v342
    %v344 = vrot.slane %v339, %v343
    %v362 = vunpack.c.l.b16 %v322
    %v363 = vunpack.c.l.b16 %v323
    %v364 = vunpack.c.l.b16 %v324
    %v365 = vunpack.c.l.b16 %v325
    %v366 = vunpack.c.l.b16 %v326
    %v367 = vunpack.c.l.b16 %v327
    %v368 = vunpack.c.l.b16 %v328
    %v369 = vunpack.c.l.b16 %v329
    %v370 = vunpack.c.l.b16 %v330
    %v371 = vunpack.c.l.b16 %v331
    %v372 = vunpack.c.l.b16 %v332
    %v373 = vunpack.c.l.b16 %v333
    %v374 = vunpack.c.l.b16 %v334
    %v375 = vunpack.c.l.b16 %v335
    %v376 = vunpack.c.l.b16 %v336
    %v377 = vunpack.c.l.b16 %v337
    %v378 = vpack.c.b16 %v363, %v362
    %v379 = vpack.c.b16 %v365, %v364
    %v380 = vpack.c.b16 %v367, %v366
    %v381 = vpack.c.b16 %v369, %v368
    %v382 = vpack.c.b16 %v371, %v370
    %v383 = vpack.c.b16 %v373, %v372
    %v384 = vpack.c.b16 %v375, %v374
    %v385 = vpack.c.b16 %v377, %v376
    %394 = vmatprep.subr.bf16.mxu0 0
    %395 = vmatpush1.bf16.msra.mxu0 %v378
    %396 = vmatprep.subr.bf16.mxu0 0
    %397 = vmatpush1.bf16.msra.mxu0 %v379
    %398 = vmatprep.subr.bf16.mxu0 0
    %399 = vmatpush1.bf16.msra.mxu0 %v380
    %400 = vmatprep.subr.bf16.mxu0 0
    %401 = vmatpush1.bf16.msra.mxu0 %v381
    %402 = vmatprep.subr.bf16.mxu0 0
    %403 = vmatpush1.bf16.msra.mxu0 %v382
    %404 = vmatprep.subr.bf16.mxu0 0
    %405 = vmatpush1.bf16.msra.mxu0 %v383
    %406 = vmatprep.subr.bf16.mxu0 0
    %407 = vmatpush1.bf16.msra.mxu0 %v384
    %408 = vmatprep.subr.bf16.mxu0 0
    %409 = vmatpush1.bf16.msra.mxu0 %v385
    %410 = vmatprep.subr.bf16.mxu0 0
    %411 = vmatpush1.bf16.msra.mxu0 0
    %412 = vmatprep.subr.bf16.mxu0 0
    %413 = vmatpush1.bf16.msra.mxu0 0
    %414 = vmatprep.subr.bf16.mxu0 0
    %415 = vmatpush1.bf16.msra.mxu0 0
    %416 = vmatprep.subr.bf16.mxu0 0
    %417 = vmatpush1.bf16.msra.mxu0 0
    %418 = vmatprep.subr.bf16.mxu0 0
    %419 = vmatpush1.bf16.msra.mxu0 0
    %420 = vmatprep.subr.bf16.mxu0 0
    %421 = vmatpush1.bf16.msra.mxu0 0
    %422 = vmatprep.subr.bf16.mxu0 0
    %423 = vmatpush1.bf16.msra.mxu0 0
    %424 = vmatprep.subr.bf16.mxu0 0
    %425 = vmatpush1.bf16.msra.mxu0 0
    %426 = vmatprep.mubr.bf16.mxu0 0
    %427 = vmatmul.mubr.bf16.gmra.mrb[0].mxu0 %v320
    %v428 = vpop.f32.mrb[0].mxu0
    %v429 = vadd.f32 %v344, %v428
    %v430 = vpop.f32.mrb[0].mxu0
    %v431 = vpop.f32.mrb[0].mxu0
    %v432 = vadd.f32 %v344, %v431
    %v433 = vpop.f32.mrb[0].mxu0
    %434 = vdwg.mxu0
    %v435 = vmax.f32 %v429, 0.0
    %v436 = vmax.f32 %v432, 0.0
    %v437 = vpack.c.bf16 %v436, %v435
    %v438 = vld [vmem:[#allocation8] sm:$0xf]
    %v439 = vld [vmem:[#allocation8 + $0x4] sm:$0xf]
    %v440 = vld [vmem:[#allocation8 + $0x8] sm:$0xf]
    %v441 = vld [vmem:[#allocation8 + $0xc] sm:$0xf]
    %v442 = vld [vmem:[#allocation8 + $0x10] sm:$0xf]
    %v443 = vld [vmem:[#allocation8 + $0x14] sm:$0xf]
    %v444 = vld [vmem:[#allocation8 + $0x18] sm:$0xf]
    %v445 = vld [vmem:[#allocation8 + $0x1c] sm:$0xf]
    %v446 = vld [vmem:[#allocation8 + $0x20] sm:$0xf]
    %v447 = vld [vmem:[#allocation8 + $0x24] sm:$0xf]
    %v448 = vld [vmem:[#allocation8 + $0x28] sm:$0xf]
    %v449 = vld [vmem:[#allocation8 + $0x2c] sm:$0xf]
    %v450 = vld [vmem:[#allocation8 + $0x30] sm:$0xf]
    %v451 = vld [vmem:[#allocation8 + $0x34] sm:$0xf]
    %v452 = vld [vmem:[#allocation8 + $0x38] sm:$0xf]
    %v453 = vld [vmem:[#allocation8 + $0x3c] sm:$0xf]
    %v454 = vld [vmem:[%s6] sm:$0x1]
    %v456 = vlaneseq
    %v457 = vshrl.u32 %v456, 7
    %v458 = vsub.s32 0, %v457
    %v459 = vrot.slane %v454, %v458
    %v477 = vunpack.c.l.b16 %v438
    %v478 = vunpack.c.l.b16 %v439
    %v479 = vunpack.c.l.b16 %v440
    %v480 = vunpack.c.l.b16 %v441
    %v481 = vunpack.c.l.b16 %v442
    %v482 = vunpack.c.l.b16 %v443
    %v483 = vunpack.c.l.b16 %v444
    %v484 = vunpack.c.l.b16 %v445
    %v485 = vunpack.c.l.b16 %v446
    %v486 = vunpack.c.l.b16 %v447
    %v487 = vunpack.c.l.b16 %v448
    %v488 = vunpack.c.l.b16 %v449
    %v489 = vunpack.c.l.b16 %v450
    %v490 = vunpack.c.l.b16 %v451
    %v491 = vunpack.c.l.b16 %v452
    %v492 = vunpack.c.l.b16 %v453
    %v493 = vpack.c.b16 %v478, %v477
    %v494 = vpack.c.b16 %v480, %v479
    %v495 = vpack.c.b16 %v482, %v481
    %v496 = vpack.c.b16 %v484, %v483
    %v497 = vpack.c.b16 %v486, %v485
    %v498 = vpack.c.b16 %v488, %v487
    %v499 = vpack.c.b16 %v490, %v489
    %v500 = vpack.c.b16 %v492, %v491
    %509 = vmatprep.subr.bf16.mxu0 0
    %510 = vmatpush1.bf16.msra.mxu0 %v493
    %511 = vmatprep.subr.bf16.mxu0 0
    %512 = vmatpush1.bf16.msra.mxu0 %v494
    %513 = vmatprep.subr.bf16.mxu0 0
    %514 = vmatpush1.bf16.msra.mxu0 %v495
    %515 = vmatprep.subr.bf16.mxu0 0
    %516 = vmatpush1.bf16.msra.mxu0 %v496
    %517 = vmatprep.subr.bf16.mxu0 0
    %518 = vmatpush1.bf16.msra.mxu0 %v497
    %519 = vmatprep.subr.bf16.mxu0 0
    %520 = vmatpush1.bf16.msra.mxu0 %v498
    %521 = vmatprep.subr.bf16.mxu0 0
    %522 = vmatpush1.bf16.msra.mxu0 %v499
    %523 = vmatprep.subr.bf16.mxu0 0
    %524 = vmatpush1.bf16.msra.mxu0 %v500
    %525 = vmatprep.subr.bf16.mxu0 0
    %526 = vmatpush1.bf16.msra.mxu0 0
    %527 = vmatprep.subr.bf16.mxu0 0
    %528 = vmatpush1.bf16.msra.mxu0 0
    %529 = vmatprep.subr.bf16.mxu0 0
    %530 = vmatpush1.bf16.msra.mxu0 0
    %531 = vmatprep.subr.bf16.mxu0 0
    %532 = vmatpush1.bf16.msra.mxu0 0
    %533 = vmatprep.subr.bf16.mxu0 0
    %534 = vmatpush1.bf16.msra.mxu0 0
    %535 = vmatprep.subr.bf16.mxu0 0
    %536 = vmatpush1.bf16.msra.mxu0 0
    %537 = vmatprep.subr.bf16.mxu0 0
    %538 = vmatpush1.bf16.msra.mxu0 0
    %539 = vmatprep.subr.bf16.mxu0 0
    %540 = vmatpush1.bf16.msra.mxu0 0
    %541 = vmatprep.mubr.bf16.mxu0 0
    %542 = vmatmul.mubr.bf16.gmra.mrb[0].mxu0 %v437
    %v543 = vpop.f32.mrb[0].mxu0
    %v544 = vadd.f32 %v459, %v543
    %v545 = vpop.f32.mrb[0].mxu0
    %v546 = vpop.f32.mrb[0].mxu0
    %v547 = vadd.f32 %v459, %v546
    %v548 = vpop.f32.mrb[0].mxu0
    %549 = vdwg.mxu0
    %v550 = vmax.f32 %v544, 0.0
    %v551 = vmax.f32 %v547, 0.0
    %v552 = vlaneseq
    %v553 = vand.u32 %v552, 127
    %vm554 = vcmp.lt.s32.totalorder %v553, 4
    %v555 = vsel %vm554, %v550, -1e+30
    %v556 = vsel %vm554, %v551, -1e+30
    %557 = vmax.xlane.f32.xlu0 %v555
    %v558 = vpop.xlane.xlu0 %557
    %559 = vmax.xlane.f32.xlu0 %v556
    %v560 = vpop.xlane.xlu0 %559
    %v561 = vsub.f32 %v555, %v558
    %v562 = vsub.f32 %v556, %v560
    %v563 = vmul.f32 %v561, 1.442695
    %v564 = vpow.pop %v563
    %v565 = vmul.f32 %v562, 1.442695
    %v566 = vpow.pop %v565
    %567 = vadd.xlane.f32.xlu0 %v564
    %v568 = vpop.xlane.xlu0 %567
    %569 = vadd.xlane.f32.xlu0 %v566
    %v570 = vpop.xlane.xlu0 %569
    %v571 = vrcp.pop %v568
    %v572 = vrcp.pop %v570
    %v573 = vmul.f32 %v564, %v571
    %v574 = vmul.f32 %v566, %v572
    %575 = vst [vmem:[#allocation10] sm:$0xff] %v573
    %576 = vst [vmem:[#allocation10 + $0x8] sm:$0xff] %v574
    // Predicated region
    $region46: #{tpu_custom_call.1} parent=1 // pred_check
      _
    $region47: #{tpu_custom_call.1} parent=1 // pred_check_branch
      %578 = sbr.rel (0) target = $region49
    $region48: #{tpu_custom_call.1} parent=1 // pred_region
      %s580 = ssub.s32 256, 256
      %581 = vsyncadd [#allocation4], %s580
      %s582 = sshll.u32 [#allocation10], 4
      %s583 = int_to_ptr.vmem [resolvable:$true] %s582
      %588 = dma.vmem_to_hbm [thread:$0]  %s583, 256, %s7, [#allocation4], 128, 128, 8
    $region49: #{tpu_custom_call.1} parent=1 // pred_fallthru
      _
    // Predicated region
    $region50: #{tpu_custom_call.1} parent=1 // pred_check
      _
    $region51: #{tpu_custom_call.1} parent=1 // pred_check_branch
      %590 = sbr.rel (0) target = $region53
    $region52: #{tpu_custom_call.1} parent=1 // pred_region
      %591 = dma.done [#allocation4], 256
    $region53: #{tpu_custom_call.1} parent=1 // pred_fallthru
      _
    %592 = vsyncpa [#allocation3], 1
    %593 = vsyncpa [#allocation6], 1
    %594 = vsyncpa [#allocation9], 1
    %595 = vsyncpa [#allocation4], 1

</llo_original>
